<compile_context>
chip_gen: v7x
topology: tpu7x:2x2x1
jax: 0.10.0
libtpu: 0.0.40
codegen_flags: <defaults>
</compile_context>

<pallas_src>
import jax
import jax.numpy as jnp
from jax.experimental import pallas as pl
from jax.experimental.pallas import tpu as pltpu

_LANE = 128
_VMEM_STREAM_BUDGET = 40 * 1024 * 1024   # double-buffered streams + resident weights
_VMEM_LIMIT_BYTES = 48 * 1024 * 1024     # raise scoped VMEM; still < v7x 64 MiB physical


def _round_up(x, m):
    return ((x + m - 1) // m) * m


def _fused_head_kernel(x_ref, w_ref, b_ref, mu_ref, lp_ref):
    # x: (TM, in_dim), w: (in_dim, 2*Dp), b: (1, 2*Dp)
    # One MXU matmul against the fused weight; the split at Dp (a multiple of 128) is
    # lane-aligned, so both stores stay unmasked and lane-dense.
    y = jnp.dot(x_ref[...], w_ref[...], preferred_element_type=jnp.float32) + b_ref[...]
    dp = mu_ref.shape[-1]
    mu_ref[...] = y[:, :dp].astype(mu_ref.dtype)
    lp_ref[...] = y[:, dp:].astype(lp_ref.dtype)


def _choose_tile_m(M, stream_row_bytes, resident_bytes):
    """Row-tile size: as large as the VMEM budget allows (amortizes the ~0.35 us/step
    grid overhead), MXU-friendly 256 granularity on v6e/v7x, and at least 2 grid steps
    when M is large so the 'parallel' axis can split across v7x's two TensorCores."""
    avail = max(_VMEM_STREAM_BUDGET - resident_bytes, 1 << 20)
    tm = min(2048, avail // (2 * stream_row_bytes), _round_up(M, 8))
    tm = max(8, (tm // 8) * 8)
    if tm >= 256:
        tm = (tm // 256) * 256
    if M >= 512 and (M + tm - 1) // tm < 2:      # v7x megacore: >=2 parallel steps
        tm = _round_up((M + 1) // 2, 256)
    return tm


def discrete_log_head_forward(x, params, out_dim, n_mixtures, *,
                              out_dtype=jnp.float32, allow_xla_fallback=True):
    """x: (B, T, in_dim) float32. Returns (mu, ln_scale, logit_prob), each of shape
    (B, T, out_dim, n_mixtures) — matching the PyTorch module with const_var=True,
    sep_var=False, lstm=False, n_mixtures > 1 (forward_t = 1)."""
    B, T, in_dim = x.shape
    M = B * T
    D = out_dim * n_mixtures
    w = params["w_fused"]                       # (in_dim, 2*Dp), precomputed at init
    b = params["b_fused"]                       # (1, 2*Dp)
    Dp = w.shape[-1] // 2
    out_itemsize = jnp.dtype(out_dtype).itemsize

    x2 = x.reshape(M, in_dim)                   # 'B T d -> (B T) d' (no data movement)

    if allow_xla_fallback and M * 2 * Dp * out_itemsize < (256 << 10):
        # Tiny problem: Pallas per-step overhead dwarfs the math; let XLA fuse the GEMM.
        y = (x2 @ w + b).astype(out_dtype)
        y_mu, y_lp = y[:, :Dp], y[:, Dp:]
    else:
        stream_row_bytes = in_dim * 4 + 2 * Dp * out_itemsize
        resident_bytes = 2 * (in_dim * 2 * Dp + 2 * Dp) * 4   # weights+bias, double-buffered
        TM = _choose_tile_m(M, stream_row_bytes, resident_bytes)
        grid = (pl.cdiv(M, TM),)                # ragged tail masked by Pallas; no pad/unpad

        y_mu, y_lp = pl.pallas_call(
            _fused_head_kernel,
            out_shape=(jax.ShapeDtypeStruct((M, Dp), out_dtype),
                       jax.ShapeDtypeStruct((M, Dp), out_dtype)),
            grid_spec=pltpu.PrefetchScalarGridSpec(
                num_scalar_prefetch=0,
                grid=grid,
                in_specs=[
                    pl.BlockSpec((TM, in_dim), lambda i: (i, 0)),     # streamed row tiles
                    pl.BlockSpec((in_dim, 2 * Dp), lambda i: (0, 0)), # VMEM-resident weights
                    pl.BlockSpec((1, 2 * Dp), lambda i: (0, 0)),      # VMEM-resident bias
                ],
                out_specs=[
                    pl.BlockSpec((TM, Dp), lambda i: (i, 0)),  # mu: lane-dense store
                    pl.BlockSpec((TM, Dp), lambda i: (i, 0)),  # logit_prob: lane-dense store
                ],
            ),
            compiler_params=pltpu.CompilerParams(
                dimension_semantics=("parallel",),
                vmem_limit_bytes=_VMEM_LIMIT_BYTES,
            ),
        )(x2, w, b)

    # Slice off the zero-padded lanes (no-op when D % 128 == 0) and reshape; XLA fuses
    # the slice with the reshape, so this is not an extra HBM round trip of the result.
    mu = y_mu[:, :D].reshape(B, T, out_dim, n_mixtures)
    logit_prob = y_lp[:, :D].reshape(B, T, out_dim, n_mixtures)

    # const_var ln_scale: (out_dim,) -> (1,1,out_dim,1) expanded over mu's shape.
    # Kept out of the kernel: it is a pure constant broadcast, not worth HBM writes.
    ln_scale = jnp.broadcast_to(
        params["ln_scale"].reshape(1, 1, out_dim, 1).astype(mu.dtype), mu.shape)
    return mu, ln_scale, logit_prob


def init_params(key, in_dim, out_dim, n_mixtures):
    """Deterministic synthetic parameters matching the module's shapes.  The fused,
    lane-padded (in_dim, 2*Dp) weight and (1, 2*Dp) bias are built ONCE here so the
    forward pass never pays a per-call concat/pad in front of a memory-bound kernel."""
    D = out_dim * n_mixtures
    Dp = _round_up(max(D, _LANE), _LANE)
    k1, k2, k3, k4, k5 = jax.random.split(key, 5)
    bound = 1.0 / jnp.sqrt(jnp.float32(in_dim))
    w_mu = jax.random.uniform(k1, (in_dim, D), jnp.float32, -bound, bound)
    b_mu = jax.random.uniform(k2, (D,), jnp.float32, -bound, bound)
    w_lp = jax.random.uniform(k3, (in_dim, D), jnp.float32, -bound, bound)
    b_lp = jax.random.uniform(k4, (D,), jnp.float32, -bound, bound)
    ln_scale = (jax.random.normal(k5, (out_dim,), jnp.float32)
                / jnp.sqrt(jnp.float32(out_dim)))

    w_fused = (jnp.zeros((in_dim, 2 * Dp), jnp.float32)
               .at[:, :D].set(w_mu)
               .at[:, Dp:Dp + D].set(w_lp))
    b_fused = (jnp.zeros((1, 2 * Dp), jnp.float32)
               .at[:, :D].set(b_mu)
               .at[:, Dp:Dp + D].set(b_lp))
    return {
        "w_mu": w_mu, "b_mu": b_mu, "w_lp": w_lp, "b_lp": b_lp, "ln_scale": ln_scale,
        "w_fused": w_fused, "b_fused": b_fused,
    }


def _reference(x, params, out_dim, n_mixtures):
    B, T, _ = x.shape
    mu = (x @ params["w_mu"] + params["b_mu"]).reshape(B, T, out_dim, n_mixtures)
    lp = (x @ params["w_lp"] + params["b_lp"]).reshape(B, T, out_dim, n_mixtures)
    ln = jnp.broadcast_to(params["ln_scale"].reshape(1, 1, out_dim, 1), mu.shape)
    return mu, ln, lp


if __name__ == "__main__":
    B, T, in_dim = 2, 4, 32
    out_dim, n_mixtures = 8, 4

    key = jax.random.PRNGKey(0)
    kx, kp = jax.random.split(key)
    x = jax.random.normal(kx, (B, T, in_dim), jnp.float32)
    params = init_params(kp, in_dim, out_dim, n_mixtures)

    # Force the Pallas path at demo shapes (the small-problem XLA fallback would
    # otherwise take over for an output this tiny).
    fwd = jax.jit(lambda xx, pp: discrete_log_head_forward(
        xx, pp, out_dim, n_mixtures, allow_xla_fallback=False))
    mu, ln_scale, logit_prob = fwd(x, params)
    jax.block_until_ready((mu, ln_scale, logit_prob))

    mu_r, ln_r, lp_r = _reference(x, params, out_dim, n_mixtures)
    assert mu.shape == (B, T, out_dim, n_mixtures)
    assert ln_scale.shape == (B, T, out_dim, n_mixtures)
    assert logit_prob.shape == (B, T, out_dim, n_mixtures)
    assert jnp.allclose(mu, mu_r, atol=1e-5, rtol=1e-5)
    assert jnp.allclose(ln_scale, ln_r, atol=1e-6)
    assert jnp.allclose(logit_prob, lp_r, atol=1e-5, rtol=1e-5)

    # TODO(synk): the lstm=True branch (_LSTMOneMany with nn.GRU) is not implemented;
    # this kernel covers the default non-LSTM / const_var path of _DiscreteLogHead.
    print("KERNEL_OK")
</pallas_src>

<mosaic_0001>
module attributes {stable_mosaic.version = 11 : i64} {
  func.func @_fused_head_kernel(%arg0: i32, %arg1: memref<8x32xf32, #tpu.memory_space<vmem>>, %arg2: memref<32x256xf32, #tpu.memory_space<vmem>>, %arg3: memref<1x256xf32, #tpu.memory_space<vmem>>, %arg4: memref<8x128xf32, #tpu.memory_space<vmem>>, %arg5: memref<8x128xf32, #tpu.memory_space<vmem>>) attributes {dimension_semantics = [#tpu.dimension_semantics<parallel>], iteration_bounds = array<i64: 1>, scalar_prefetch = 0 : i64, scratch_operands = 0 : i64, tpu.core_type = #tpu.core_type<tc>, window_params = [{transform_indices = @transform_0, window_bounds = array<i64: 8, 32>}, {pipeline_mode = #tpu.pipeline_mode<synchronous>, transform_indices = @transform_1, window_bounds = array<i64: 32, 256>}, {pipeline_mode = #tpu.pipeline_mode<synchronous>, transform_indices = @transform_2, window_bounds = array<i64: 1, 256>}, {transform_indices = @transform_3, window_bounds = array<i64: 8, 128>}, {transform_indices = @transform_4, window_bounds = array<i64: 8, 128>}]} {
    %c0 = arith.constant 0 : index
    %c0_0 = arith.constant 0 : index
    %0 = vector.load %arg1[%c0, %c0_0] : memref<8x32xf32, #tpu.memory_space<vmem>>, vector<8x32xf32>
    %c0_1 = arith.constant 0 : index
    %c0_2 = arith.constant 0 : index
    %1 = vector.load %arg2[%c0_1, %c0_2] : memref<32x256xf32, #tpu.memory_space<vmem>>, vector<32x256xf32>
    %cst = arith.constant dense<0.000000e+00> : vector<8x256xf32>
    %2 = tpu.matmul %0, %1, %cst {dimension_numbers = #tpu.dot_dimension_numbers<[1], [0], [0], [1], [0, 0, 1, 1], [], []>} : vector<8x32xf32>, vector<32x256xf32>, vector<8x256xf32> -> vector<8x256xf32>
    %c0_3 = arith.constant 0 : index
    %c0_4 = arith.constant 0 : index
    %3 = vector.load %arg3[%c0_3, %c0_4] : memref<1x256xf32, #tpu.memory_space<vmem>>, vector<1x256xf32>
    %4 = vector.broadcast %3 : vector<1x256xf32> to vector<8x256xf32>
    %5 = arith.addf %2, %4 : vector<8x256xf32>
    %6 = vector.extract_strided_slice %5 {offsets = [0, 0], sizes = [8, 128], strides = [1, 1]} : vector<8x256xf32> to vector<8x128xf32>
    %c0_5 = arith.constant 0 : index
    %c0_6 = arith.constant 0 : index
    %7 = vector.load %arg4[%c0_5, %c0_6] : memref<8x128xf32, #tpu.memory_space<vmem>>, vector<8x128xf32>
    tpu.vector_store %arg4[%c0_5, %c0_6], %6 {strides = array<i32>} : memref<8x128xf32, #tpu.memory_space<vmem>>, vector<8x128xf32>,
    %8 = vector.extract_strided_slice %5 {offsets = [0, 128], sizes = [8, 128], strides = [1, 1]} : vector<8x256xf32> to vector<8x128xf32>
    %c0_7 = arith.constant 0 : index
    %c0_8 = arith.constant 0 : index
    %9 = vector.load %arg5[%c0_7, %c0_8] : memref<8x128xf32, #tpu.memory_space<vmem>>, vector<8x128xf32>
    tpu.vector_store %arg5[%c0_7, %c0_8], %8 {strides = array<i32>} : memref<8x128xf32, #tpu.memory_space<vmem>>, vector<8x128xf32>,
    return
  }
  func.func @transform_0(%arg0: i32) -> (i32, i32) {
    %c0_i32 = arith.constant 0 : i32
    %c0_i32_0 = arith.constant 0 : i32
    return %arg0, %c0_i32 : i32, i32
  }
  func.func @transform_1(%arg0: i32) -> (i32, i32) {
    %c0_i32 = arith.constant 0 : i32
    %c0_i32_0 = arith.constant 0 : i32
    %c0_i32_1 = arith.constant 0 : i32
    return %c0_i32, %c0_i32_0 : i32, i32
  }
  func.func @transform_2(%arg0: i32) -> (i32, i32) {
    %c0_i32 = arith.constant 0 : i32
    %c0_i32_0 = arith.constant 0 : i32
    %c0_i32_1 = arith.constant 0 : i32
    return %c0_i32, %c0_i32_0 : i32, i32
  }
  func.func @transform_3(%arg0: i32) -> (i32, i32) {
    %c0_i32 = arith.constant 0 : i32
    %c0_i32_0 = arith.constant 0 : i32
    return %arg0, %c0_i32 : i32, i32
  }
  func.func @transform_4(%arg0: i32) -> (i32, i32) {
    %c0_i32 = arith.constant 0 : i32
    %c0_i32_0 = arith.constant 0 : i32
    return %arg0, %c0_i32 : i32, i32
  }
}

</mosaic_0001>

<llo_original>
// kernel: _lambda_.1
$region0: #{_lambda_.1}
  #allocation0 [shape = 'u32[]', space=smem, size = 0x4, offset = 0x4, fixed_abs, tag = 'smem constant byte address 0x4 - core index']
  #allocation1 [shape = 'u32[144,128]{1,0:T(1,128)}', space=vmem, size = 0x12000, scoped, tag = 'internal scratch']
  %s0 = inlined_call_operand.vmem [shape: f32[8,32], index: 0, kind: input, shape index: {}]
  %s1 = inlined_call_operand.hbm [shape: f32[32,256], index: 1, kind: input, shape index: {}]
  %s2 = inlined_call_operand.vmem [shape: f32[1,256], index: 2, kind: input, shape index: {}]
  %s3 = inlined_call_operand.vmem [shape: f32[8,128], index: 3, kind: output, shape index: {0}]
  %s4 = inlined_call_operand.vmem [shape: f32[8,128], index: 4, kind: output, shape index: {1}]
  %5 = xla_tuple %s3, %s4
  %s6 = sld [smem:[#allocation0]]
  $region34: #{_lambda_.1} parent=0
    _
  %s8 = ssub.s32 1, %s6
  %s9 = scalar_select 0, %s8, %s6
  $region1: #{_lambda_.1} parent=0
    #allocation2 [shape = 'u8[32768]{0}', space=vmem, size = 0x8000, scoped, tag = 'input window, operand 1, single buffered']
    #allocation3 [shape = 's32[1]{0}', space=sflag, size = 0x4, scoped, tag = 'scoped memory for _lambda_.1']
    %10 = vsyncpa [#allocation3], 0
    // Predicated region
    $region2: #{_lambda_.1} parent=1 // pred_check
      _
    $region3: #{_lambda_.1} parent=1 // pred_check_branch
      %12 = sbr.rel (0) target = $region5
    $region4: #{_lambda_.1} parent=1 // pred_region
      _
    $region5: #{_lambda_.1} parent=1 // pred_fallthru
      _
    // Predicated region
    $region6: #{_lambda_.1} parent=1 // pred_check
      _
    $region7: #{_lambda_.1} parent=1 // pred_check_branch
      %14 = sbr.rel (0) target = $region9
    $region8: #{_lambda_.1} parent=1 // pred_region
      %s16 = ssub.s32 1024, 1024
      %17 = vsyncadd [#allocation3], %s16
      %s18 = sshll.u32 [#allocation2], 4
      %s19 = int_to_ptr.vmem [resolvable:$true] %s18
      %24 = dma.hbm_to_vmem [thread:$0]  %s1, 1024, %s19, [#allocation3], 256, 256, 16
    $region9: #{_lambda_.1} parent=1 // pred_fallthru
      _
    // Predicated region
    $region10: #{_lambda_.1} parent=1 // pred_check
      _
    $region11: #{_lambda_.1} parent=1 // pred_check_branch
      %26 = sbr.rel (0) target = $region13
    $region12: #{_lambda_.1} parent=1 // pred_region
      _
    $region13: #{_lambda_.1} parent=1 // pred_fallthru
      _
    // Predicated region
    $region14: #{_lambda_.1} parent=1 // pred_check
      _
    $region15: #{_lambda_.1} parent=1 // pred_check_branch
      %28 = sbr.rel (0) target = $region17
    $region16: #{_lambda_.1} parent=1 // pred_region
      %29 = dma.done [#allocation3], 1024
    $region17: #{_lambda_.1} parent=1 // pred_fallthru
      _
    %v30 = vld [vmem:[%s0] sm:$0xff]
    %v31 = vld [vmem:[#allocation2] sm:$0xff]
    %v32 = vld [vmem:[#allocation2 + $0x8] sm:$0xff]
    %v33 = vld [vmem:[#allocation2 + $0x10] sm:$0xff]
    %v34 = vld [vmem:[#allocation2 + $0x18] sm:$0xff]
    %v35 = vld [vmem:[#allocation2 + $0x20] sm:$0xff]
    %v36 = vld [vmem:[#allocation2 + $0x28] sm:$0xff]
    %v37 = vld [vmem:[#allocation2 + $0x30] sm:$0xff]
    %v38 = vld [vmem:[#allocation2 + $0x38] sm:$0xff]
    %v39 = vld [vmem:[%s2] sm:$0x3]
    %v41 = vlaneseq
    %v42 = vshrl.u32 %v41, 7
    %v43 = vsub.s32 0, %v42
    %v44 = vrot.slane %v39, %v43
    %v45 = vlaneseq
    %v46 = vshrl.u32 %v45, 7
    %v47 = vsub.s32 1, %v46
    %v48 = vrot.slane %v39, %v47
    %vm51 = vcmask 261120
    %v53 = vsel %vm51, %v30, 0
    %55 = vmatprep.subr.mxu0 %v32
    %56 = vmatpush1.msra.mxu0 %v31
    %57 = vmatprep.subr.mxu0 %v34
    %58 = vmatpush1.msra.mxu0 %v33
    %59 = vmatprep.subr.mxu0 %v36
    %60 = vmatpush1.msra.mxu0 %v35
    %61 = vmatprep.subr.mxu0 %v38
    %62 = vmatpush1.msra.mxu0 %v37
    %63 = vmatprep.subr.mxu0 0.0
    %64 = vmatpush1.msra.mxu0 0.0
    %65 = vmatprep.subr.mxu0 0.0
    %66 = vmatpush1.msra.mxu0 0.0
    %67 = vmatprep.subr.mxu0 0.0
    %68 = vmatpush1.msra.mxu0 0.0
    %69 = vmatprep.subr.mxu0 0.0
    %70 = vmatpush1.msra.mxu0 0.0
    %71 = vmatprep.subr.mxu0 0.0
    %72 = vmatpush1.msra.mxu0 0.0
    %73 = vmatprep.subr.mxu0 0.0
    %74 = vmatpush1.msra.mxu0 0.0
    %75 = vmatprep.subr.mxu0 0.0
    %76 = vmatpush1.msra.mxu0 0.0
    %77 = vmatprep.subr.mxu0 0.0
    %78 = vmatpush1.msra.mxu0 0.0
    %79 = vmatprep.subr.mxu0 0.0
    %80 = vmatpush1.msra.mxu0 0.0
    %81 = vmatprep.subr.mxu0 0.0
    %82 = vmatpush1.msra.mxu0 0.0
    %83 = vmatprep.subr.mxu0 0.0
    %84 = vmatpush1.msra.mxu0 0.0
    %85 = vmatprep.subr.mxu0 0.0
    %86 = vmatpush1.msra.mxu0 0.0
    %87 = vmatprep.subr.mxu0 0.0
    %88 = vmatpush1.msra.mxu0 0.0
    %89 = vmatprep.subr.mxu0 0.0
    %90 = vmatpush1.msra.mxu0 0.0
    %91 = vmatprep.subr.mxu0 0.0
    %92 = vmatpush1.msra.mxu0 0.0
    %93 = vmatprep.subr.mxu0 0.0
    %94 = vmatpush1.msra.mxu0 0.0
    %95 = vmatprep.subr.mxu0 0.0
    %96 = vmatpush1.msra.mxu0 0.0
    %97 = vmatprep.subr.mxu0 0.0
    %98 = vmatpush1.msra.mxu0 0.0
    %99 = vmatprep.subr.mxu0 0.0
    %100 = vmatpush1.msra.mxu0 0.0
    %101 = vmatprep.subr.mxu0 0.0
    %102 = vmatpush1.msra.mxu0 0.0
    %103 = vmatprep.subr.mxu0 0.0
    %104 = vmatpush1.msra.mxu0 0.0
    %105 = vmatprep.subr.mxu0 0.0
    %106 = vmatpush1.msra.mxu0 0.0
    %107 = vmatprep.subr.mxu0 0.0
    %108 = vmatpush1.msra.mxu0 0.0
    %109 = vmatprep.subr.mxu0 0.0
    %110 = vmatpush1.msra.mxu0 0.0
    %111 = vmatprep.subr.mxu0 0.0
    %112 = vmatpush1.msra.mxu0 0.0
    %113 = vmatprep.subr.mxu0 0.0
    %114 = vmatpush1.msra.mxu0 0.0
    %115 = vmatprep.subr.mxu0 0.0
    %116 = vmatpush1.msra.mxu0 0.0
    %117 = vmatprep.subr.mxu0 0.0
    %118 = vmatpush1.msra.mxu0 0.0
    %119 = vmatprep.mubr.f32.mxu0 0.0
    %120 = vmatmul.mubr.f32.gmra.mrb[0].mxu0 %v53
    %v121 = vpop.f32.mrb[0].mxu0
    %v122 = vadd.f32 %v44, %v121
    %v123 = vpop.f32.mrb[0].mxu0
    %v124 = vadd.f32 %v48, %v123
    %125 = vdwg.mxu0
    %126 = vst [vmem:[%s3] sm:$0xff] %v122
    %127 = vst [vmem:[%s4] sm:$0xff] %v124
    // Predicated region
    $region18: #{_lambda_.1} parent=1 // pred_check
      _
    $region19: #{_lambda_.1} parent=1 // pred_check_branch
      %129 = sbr.rel (0) target = $region21
    $region20: #{_lambda_.1} parent=1 // pred_region
      _
    $region21: #{_lambda_.1} parent=1 // pred_fallthru
      _
    // Predicated region
    $region22: #{_lambda_.1} parent=1 // pred_check
      _
    $region23: #{_lambda_.1} parent=1 // pred_check_branch
      %131 = sbr.rel (0) target = $region25
    $region24: #{_lambda_.1} parent=1 // pred_region
      _
    $region25: #{_lambda_.1} parent=1 // pred_fallthru
      _
    // Predicated region
    $region26: #{_lambda_.1} parent=1 // pred_check
      _
    $region27: #{_lambda_.1} parent=1 // pred_check_branch
      %133 = sbr.rel (0) target = $region29
    $region28: #{_lambda_.1} parent=1 // pred_region
      _
    $region29: #{_lambda_.1} parent=1 // pred_fallthru
      _
    // Predicated region
    $region30: #{_lambda_.1} parent=1 // pred_check
      _
    $region31: #{_lambda_.1} parent=1 // pred_check_branch
      %135 = sbr.rel (0) target = $region33
    $region32: #{_lambda_.1} parent=1 // pred_region
      _
    $region33: #{_lambda_.1} parent=1 // pred_fallthru
      _
    %136 = vsyncpa [#allocation3], 1

</llo_original>
